<compile_context>
chip_gen: v7x
topology: tpu7x:2x2x1
jax: 0.10.0
libtpu: 0.0.40
codegen_flags: <defaults>
</compile_context>

<pallas_src>
import jax
import jax.numpy as jnp
from jax.experimental import pallas as pl
from jax.experimental.pallas import tpu as pltpu


def _group_all_kernel(xyzt_ref, feat_ref, out_ref):
    # xyzt_ref: (Bt, 3, tn)   feat_ref: (Bt, C, tn)   out_ref: (Bt, 3+C, tn)
    # Two direct sliced stores instead of a concatenate: no (Bt, 3+C, tn)
    # temporary, no XLU sublane-stitching at the non-8-aligned channel-3
    # boundary.  The masked sublane stores this produces are hidden under the
    # HBM-bound DMA of this pure-copy kernel.
    out_ref[:, 0:3, :] = xyzt_ref[...].astype(out_ref.dtype)
    out_ref[:, 3:, :] = feat_ref[...].astype(out_ref.dtype)


def _pad(v: int, m: int) -> int:
    return -(-v // m) * m


def _cdiv(a: int, b: int) -> int:
    return -(-a // b)


def _vmem_capacity_bytes() -> int:
    """Physical VMEM of the current generation (128 MiB v5e/v6e, 64 MiB v7x)."""
    try:
        info = pltpu.get_tpu_info()
        cap = int(getattr(info, "vmem_capacity_bytes", 0))
        if cap > 0:
            return cap
    except Exception:
        pass
    return 64 * 1024 * 1024  # conservative (v7x-sized) fallback


def _step_bytes(bt: int, tn: int, c: int) -> int:
    """Conservative (f32, sublane/lane padded) single-buffer footprint of one
    grid step: xyz_t block + features block + output block."""
    cols = _pad(tn, 128)
    return bt * cols * 4 * (_pad(3, 8) + _pad(c, 8) + _pad(3 + c, 8))


def _choose_tiles(b: int, n: int, c: int, budget: int):
    """Pick (Bt, tn, b_steps, n_steps)."""
    # Lane tile: prefer full rows (fully contiguous DMA segments, fewest grid
    # steps); otherwise the largest multiple of 128 that fits the budget,
    # tiled with cdiv so a ragged N just yields a masked last block.
    if _step_bytes(1, n, c) <= budget:
        tn = n
    else:
        tn = 128
        for cand in (8192, 4096, 2048, 1024, 512, 256, 128):
            if cand < n and _step_bytes(1, cand, c) <= budget:
                tn = cand
                break
    n_steps = _cdiv(n, tn)

    # Batch tile: largest divisor of B whose step footprint fits the budget
    # (amortizes the ~0.35us per-step overhead for small point clouds).
    bt = 1
    for d in range(1, b + 1):
        if b % d == 0 and _step_bytes(d, tn, c) <= budget:
            bt = d
    b_steps = b // bt

    # Keep at least 2 grid steps so both v7x TensorCores get work; harmless
    # (one extra tiny step) on single-core v5e/v6e.
    if b_steps * n_steps == 1:
        if b >= 2:
            for d in range(b // 2, 0, -1):
                if b % d == 0:
                    bt = d
                    break
            b_steps = b // bt
        elif n >= 256:
            tn = max(128, (_cdiv(n, 2) // 128) * 128)
            n_steps = _cdiv(n, tn)
    return bt, tn, b_steps, n_steps


def group_all(xyz, new_xyz=None, features=None, *, single_buffer_budget=None):
    """Pallas implementation of GroupAll.forward."""
    del new_xyz  # unused, as in the PyTorch module
    B, N, _ = xyz.shape

    if features is None:
        # Identity data movement: skip the kernel entirely (a copy kernel can
        # never beat "no copy"); transpose + metadata-only reshape.
        return jnp.transpose(xyz, (0, 2, 1)).reshape(B, 3, 1, N)

    C = features.shape[1]
    out_dtype = jnp.promote_types(xyz.dtype, features.dtype)

    cap = _vmem_capacity_bytes()
    if single_buffer_budget is None:
        # ~16 MiB/step on 128 MiB parts (v5e/v6e), ~8 MiB/step on 64 MiB (v7x);
        # double-buffering by the pipeliner then stays well inside the limit.
        single_buffer_budget = min(16 * 1024 * 1024, cap // 8)
    vmem_limit = min(64 * 1024 * 1024, cap // 2)

    Bt, tn, b_steps, n_steps = _choose_tiles(B, N, C, single_buffer_budget)

    # Lane-dense layout for the kernel: (B, 3, N).  If xyz is materialized in
    # HBM this is one extra read+write of the small 3*N*B xyz slab; accepted
    # because it keeps the kernel block lane-dense (no (N, 3) layout waste).
    xyz_t = jnp.transpose(xyz, (0, 2, 1))

    bytes_accessed = (
        B * 3 * N * xyz.dtype.itemsize
        + B * C * N * features.dtype.itemsize
        + B * (3 + C) * N * jnp.dtype(out_dtype).itemsize)

    # TODO(synk): if xprof shows exposed per-step DMA gaps on v7x, add
    # pipeline_mode=pl.Buffered(3) to the feature/output BlockSpecs.
    out = pl.pallas_call(
        _group_all_kernel,
        out_shape=jax.ShapeDtypeStruct((B, 3 + C, N), out_dtype),
        grid=(b_steps, n_steps),
        in_specs=[
            pl.BlockSpec((Bt, 3, tn), lambda b, n: (b, 0, n)),
            pl.BlockSpec((Bt, C, tn), lambda b, n: (b, 0, n)),
        ],
        out_specs=pl.BlockSpec((Bt, 3 + C, tn), lambda b, n: (b, 0, n)),
        compiler_params=pltpu.CompilerParams(
            dimension_semantics=("parallel", "parallel"),
            vmem_limit_bytes=vmem_limit),
        cost_estimate=pl.CostEstimate(
            flops=0, transcendentals=0, bytes_accessed=int(bytes_accessed)),
    )(xyz_t, features)
    return out.reshape(B, 3 + C, 1, N)  # metadata-only reshape


def _group_all_reference(xyz, features=None):
    """Pure-JAX reference mirroring the PyTorch code."""
    grouped_xyz = xyz[:, None, :, :]                                   # (B,1,N,3)
    if features is not None:
        trans = jnp.transpose(features, (0, 2, 1))[:, None, :, :]      # (B,1,N,C)
        new_features = jnp.concatenate([grouped_xyz, trans], axis=-1)  # (B,1,N,3+C)
    else:
        new_features = grouped_xyz
    return jnp.transpose(new_features, (0, 3, 1, 2))                   # (B,3+C,1,N)


if __name__ == "__main__":
    key = jax.random.PRNGKey(0)
    k1, k2, k3, k4, k5, k6, k7 = jax.random.split(key, 7)

    # Small shapes matching the module's intended use.
    B, N, C, npoint = 2, 16, 4, 1
    xyz = jax.random.normal(k1, (B, N, 3), dtype=jnp.float32)
    new_xyz = jax.random.normal(k2, (B, npoint, 3), dtype=jnp.float32)
    features = jax.random.normal(k3, (B, C, N), dtype=jnp.float32)

    # features path (Pallas kernel)
    out = jax.block_until_ready(group_all(xyz, new_xyz, features))
    ref = _group_all_reference(xyz, features)
    assert out.shape == (B, 3 + C, 1, N), out.shape
    assert jnp.array_equal(out, ref), "mismatch vs reference (features path)"

    # xyz-only path (pure data movement, no kernel)
    out2 = jax.block_until_ready(group_all(xyz, new_xyz, None))
    ref2 = _group_all_reference(xyz, None)
    assert out2.shape == (B, 3, 1, N), out2.shape
    assert jnp.array_equal(out2, ref2), "mismatch vs reference (xyz-only path)"

    # Lane tiling (N multiple of 128), C not a multiple of 8, mixed dtypes
    # (bf16 features + f32 xyz -> promoted f32 output).
    B2, N2, C2 = 2, 256, 5
    xyz_b = jax.random.normal(k4, (B2, N2, 3), dtype=jnp.float32)
    feat_b = jax.random.normal(k5, (B2, C2, N2), dtype=jnp.float32).astype(jnp.bfloat16)
    out3 = jax.block_until_ready(group_all(xyz_b, None, feat_b))
    ref3 = _group_all_reference(xyz_b, feat_b)
    assert out3.shape == (B2, 3 + C2, 1, N2), out3.shape
    assert out3.dtype == ref3.dtype, (out3.dtype, ref3.dtype)
    assert jnp.array_equal(out3, ref3), "mismatch vs reference (tiled/bf16 path)"

    # Ragged N (not a multiple of 128) with a forced tiny budget to exercise
    # the cdiv-tiled, masked-last-block path and a multi-step grid.
    B3, N3, C3 = 2, 200, 5
    xyz_r = jax.random.normal(k6, (B3, N3, 3), dtype=jnp.float32)
    feat_r = jax.random.normal(k7, (B3, C3, N3), dtype=jnp.float32)
    out4 = jax.block_until_ready(
        group_all(xyz_r, None, feat_r, single_buffer_budget=16 * 1024))
    ref4 = _group_all_reference(xyz_r, feat_r)
    assert out4.shape == (B3, 3 + C3, 1, N3), out4.shape
    assert jnp.array_equal(out4, ref4), "mismatch vs reference (ragged-N path)"

    print("KERNEL_OK")
</pallas_src>

<mosaic_0001>
module attributes {stable_mosaic.version = 11 : i64} {
  func.func @_group_all_kernel(%arg0: i32, %arg1: i32, %arg2: memref<1x3x16xf32, #tpu.memory_space<vmem>>, %arg3: memref<1x4x16xf32, #tpu.memory_space<vmem>>, %arg4: memref<1x7x16xf32, #tpu.memory_space<vmem>>) attributes {dimension_semantics = [#tpu.dimension_semantics<parallel>, #tpu.dimension_semantics<parallel>], iteration_bounds = array<i64: 2, 1>, scalar_prefetch = 0 : i64, scratch_operands = 0 : i64, tpu.core_type = #tpu.core_type<tc>, window_params = [{transform_indices = @transform_0, window_bounds = array<i64: 1, 3, 16>}, {transform_indices = @transform_1, window_bounds = array<i64: 1, 4, 16>}, {transform_indices = @transform_2, window_bounds = array<i64: 1, 7, 16>}]} {
    %c0 = arith.constant 0 : index
    %c0_0 = arith.constant 0 : index
    %c0_1 = arith.constant 0 : index
    %0 = vector.load %arg2[%c0, %c0_0, %c0_1] : memref<1x3x16xf32, #tpu.memory_space<vmem>>, vector<1x3x16xf32>
    %c0_2 = arith.constant 0 : index
    %c0_3 = arith.constant 0 : index
    %c0_4 = arith.constant 0 : index
    %1 = vector.load %arg4[%c0_2, %c0_3, %c0_4] : memref<1x7x16xf32, #tpu.memory_space<vmem>>, vector<1x3x16xf32>
    tpu.vector_store %arg4[%c0_2, %c0_3, %c0_4], %0 {strides = array<i32>} : memref<1x7x16xf32, #tpu.memory_space<vmem>>, vector<1x3x16xf32>,
    %c0_5 = arith.constant 0 : index
    %c0_6 = arith.constant 0 : index
    %c0_7 = arith.constant 0 : index
    %2 = vector.load %arg3[%c0_5, %c0_6, %c0_7] : memref<1x4x16xf32, #tpu.memory_space<vmem>>, vector<1x4x16xf32>
    %c0_8 = arith.constant 0 : index
    %c3 = arith.constant 3 : index
    %c0_9 = arith.constant 0 : index
    %3 = vector.load %arg4[%c0_8, %c3, %c0_9] : memref<1x7x16xf32, #tpu.memory_space<vmem>>, vector<1x4x16xf32>
    tpu.vector_store %arg4[%c0_8, %c3, %c0_9], %2 {strides = array<i32>} : memref<1x7x16xf32, #tpu.memory_space<vmem>>, vector<1x4x16xf32>,
    return
  }
  func.func @transform_0(%arg0: i32, %arg1: i32) -> (i32, i32, i32) {
    %c0_i32 = arith.constant 0 : i32
    %c0_i32_0 = arith.constant 0 : i32
    return %arg0, %c0_i32, %arg1 : i32, i32, i32
  }
  func.func @transform_1(%arg0: i32, %arg1: i32) -> (i32, i32, i32) {
    %c0_i32 = arith.constant 0 : i32
    %c0_i32_0 = arith.constant 0 : i32
    return %arg0, %c0_i32, %arg1 : i32, i32, i32
  }
  func.func @transform_2(%arg0: i32, %arg1: i32) -> (i32, i32, i32) {
    %c0_i32 = arith.constant 0 : i32
    %c0_i32_0 = arith.constant 0 : i32
    return %arg0, %c0_i32, %arg1 : i32, i32, i32
  }
}

</mosaic_0001>

<llo_original>
// kernel: tpu_custom_call.1
$region0: #{tpu_custom_call.1}
  #allocation0 [shape = 'u32[]', space=smem, size = 0x4, offset = 0x4, fixed_abs, tag = 'smem constant byte address 0x4 - core index']
  #allocation1 [shape = 'u32[144,128]{1,0:T(1,128)}', space=vmem, size = 0x12000, scoped, tag = 'internal scratch']
  %s0 = inlined_call_operand.vmem [shape: f32[2,3,16], index: 0, kind: input, shape index: {}]
  %s1 = inlined_call_operand.vmem [shape: f32[2,4,16], index: 1, kind: input, shape index: {}]
  %s2 = inlined_call_operand.vmem [shape: f32[2,7,16], index: 2, kind: output, shape index: {}]
  %s3 = sld [smem:[#allocation0]]
  $region41: #{tpu_custom_call.1} parent=0
    _
  %s5 = ssub.s32 1, %s3
  %s6 = scalar_select 0, %s5, %s3
  loop: start=0, step=1, limit=4
  $region2: #{tpu_custom_call.1} parent=0 // loop_pre_header
    _
  $region3: #{tpu_custom_call.1} parent=0 // loop_header
    %s8 = sphi 0, %s12
    %p9 = scmp.ge.s32.totalorder %s8, 4
    %s15 = sphi 0, %s27
    %s16 = sphi 0, %s23
    %s17 = sphi 0, %s15
    %s18 = sphi 0, %s16
    %s19 = sphi 0, %s17
    %s20 = sphi 0, %s18
    %s32 = sphi 0, %s34
    %s35 = sphi 0, %s32
    %s36 = sphi 0, %s35
    %s52 = sphi 0, %s36
    %s60 = sphi 0, %s62
    %s63 = sphi 0, %s60
    %s64 = sphi 0, %s63
    %s80 = sphi 0, %s64
    %s88 = sphi 0, %s90
    %s91 = sphi 0, %s88
    %s92 = sphi 0, %s91
    %s108 = sphi 0, %s92
  $region4: #{tpu_custom_call.1} parent=0 // loop_header_branch
    %11 = sbr.rel (%p9) target = $region8
  $region5: #{tpu_custom_call.1} parent=0 // loop_body
    %s13 = ssub.s32 %s8, 1
    %s14 = ssub.s32 %s8, 2
    %s21 = sadd.s32 1, %s16
    %p22 = scmp.ge.s32.totalorder %s21, 1
    %s23 = scalar_select %p22, 0, %s21
    %s24 = sadd.s32 1, %s15
    %s25 = scalar_select %p22, %s24, %s15
    %p26 = scmp.ge.s32.totalorder %s25, 2
    %s27 = scalar_select %p26, 0, %s25
    %s28 = ssub.s32 %s15, %s27
    %s29 = ssub.s32 %s16, %s23
    %s30 = sor.u32 %s28, %s29
    %p31 = scmp.eq.s32.totalorder %s30, 0
    %s33 = sadd.s32 %s32, 1
    %s34 = scalar_select %p31, %s32, %s33
    %p37 = pneg %p31
    %p38 = scmp.eq.s32.totalorder %s8, 1
    %p39 = por %p37, %p38
    %p40 = scmp.ne.s32.totalorder %s32, %s35
    %p41 = scmp.eq.s32.totalorder %s8, 0
    %p42 = por %p40, %p41
    %p43 = scmp.ne.s32.totalorder %s32, %s35
    %p44 = scmp.eq.s32.totalorder %s13, 1
    %p45 = por %p43, %p44
    %p46 = scmp.ne.s32.totalorder %s35, %s36
    %p47 = scmp.eq.s32.totalorder %s13, 0
    %p48 = por %p46, %p47
    %p49 = scmp.ne.s32.totalorder %s35, %s36
    %p50 = scmp.eq.s32.totalorder %s14, 1
    %p51 = por %p49, %p50
    %p53 = scmp.ne.s32.totalorder %s36, %s52
    %p54 = scmp.eq.s32.totalorder %s14, 0
    %p55 = por %p53, %p54
    %s56 = ssub.s32 %s15, %s27
    %s57 = ssub.s32 %s16, %s23
    %s58 = sor.u32 %s56, %s57
    %p59 = scmp.eq.s32.totalorder %s58, 0
    %s61 = sadd.s32 %s60, 1
    %s62 = scalar_select %p59, %s60, %s61
    %p65 = pneg %p59
    %p66 = scmp.eq.s32.totalorder %s8, 1
    %p67 = por %p65, %p66
    %p68 = scmp.ne.s32.totalorder %s60, %s63
    %p69 = scmp.eq.s32.totalorder %s8, 0
    %p70 = por %p68, %p69
    %p71 = scmp.ne.s32.totalorder %s60, %s63
    %p72 = scmp.eq.s32.totalorder %s13, 1
    %p73 = por %p71, %p72
    %p74 = scmp.ne.s32.totalorder %s63, %s64
    %p75 = scmp.eq.s32.totalorder %s13, 0
    %p76 = por %p74, %p75
    %p77 = scmp.ne.s32.totalorder %s63, %s64
    %p78 = scmp.eq.s32.totalorder %s14, 1
    %p79 = por %p77, %p78
    %p81 = scmp.ne.s32.totalorder %s64, %s80
    %p82 = scmp.eq.s32.totalorder %s14, 0
    %p83 = por %p81, %p82
    %s84 = ssub.s32 %s15, %s27
    %s85 = ssub.s32 %s16, %s23
    %s86 = sor.u32 %s84, %s85
    %p87 = scmp.eq.s32.totalorder %s86, 0
    %s89 = sadd.s32 %s88, 1
    %s90 = scalar_select %p87, %s88, %s89
    %p93 = pneg %p87
    %p94 = scmp.eq.s32.totalorder %s8, 1
    %p95 = por %p93, %p94
    %p96 = scmp.ne.s32.totalorder %s88, %s91
    %p97 = scmp.eq.s32.totalorder %s8, 0
    %p98 = por %p96, %p97
    %p99 = scmp.ne.s32.totalorder %s88, %s91
    %p100 = scmp.eq.s32.totalorder %s13, 1
    %p101 = por %p99, %p100
    %p102 = scmp.ne.s32.totalorder %s91, %s92
    %p103 = scmp.eq.s32.totalorder %s13, 0
    %p104 = por %p102, %p103
    %p105 = scmp.ne.s32.totalorder %s91, %s92
    %p106 = scmp.eq.s32.totalorder %s14, 1
    %p107 = por %p105, %p106
    %p109 = scmp.ne.s32.totalorder %s92, %s108
    %p110 = scmp.eq.s32.totalorder %s14, 0
    %p111 = por %p109, %p110
    %p112 = scmp.le.s32.totalorder 1, %s8
    %p113 = scmp.lt.s32.totalorder %s8, 3
    %p114 = pnand %p112, %p113
    %p115 = pneg %p114
    // Predicated region
    $region9: #{tpu_custom_call.1} parent=5 // pred_check
      _
    $region10: #{tpu_custom_call.1} parent=5 // pred_check_branch
      %117 = sbr.rel (%p114) target = $region12
    $region11: #{tpu_custom_call.1} parent=5 // pred_region
      %s118 = ssub.s32 %s8, 1
    $region12: #{tpu_custom_call.1} parent=5 // pred_fallthru
      _
    %p119 = scmp.lt.s32.totalorder %s8, 2
    // Predicated region
    $region13: #{tpu_custom_call.1} parent=5 // pred_check
      %p120 = pneg %p119
    $region14: #{tpu_custom_call.1} parent=5 // pred_check_branch
      %122 = sbr.rel (%p120) target = $region16
    $region15: #{tpu_custom_call.1} parent=5 // pred_region
      // Predicated region
      $region17: #{tpu_custom_call.1} parent=15 // pred_check
        %p123 = pneg %p42
      $region18: #{tpu_custom_call.1} parent=15 // pred_check_branch
        %125 = sbr.rel (%p123) target = $region20
      $region19: #{tpu_custom_call.1} parent=15 // pred_region
        %p126 = scmp.lt.s32.totalorder %s15, 1
        %s127 = scalar_select %p126, %s15, 1
        %p128 = scmp.lt.s32.totalorder %s16, 0
        %s129 = scalar_select %p128, %s16, 0
        %s130 = sadd.s32 %s129, %s127
        %s131 = smul.addr %s130, 4
        %s132 = scalar_lea.vmem %s0, %s131
      $region20: #{tpu_custom_call.1} parent=15 // pred_fallthru
        _
      // Predicated region
      $region21: #{tpu_custom_call.1} parent=15 // pred_check
        %p133 = pneg %p70
      $region22: #{tpu_custom_call.1} parent=15 // pred_check_branch
        %135 = sbr.rel (%p133) target = $region24
      $region23: #{tpu_custom_call.1} parent=15 // pred_region
        %p136 = scmp.lt.s32.totalorder %s15, 1
        %s137 = scalar_select %p136, %s15, 1
        %p138 = scmp.lt.s32.totalorder %s16, 0
        %s139 = scalar_select %p138, %s16, 0
        %s140 = sadd.s32 %s139, %s137
        %s141 = smul.addr %s140, 4
        %s142 = scalar_lea.vmem %s1, %s141
      $region24: #{tpu_custom_call.1} parent=15 // pred_fallthru
        _
    $region16: #{tpu_custom_call.1} parent=5 // pred_fallthru
      _
    %p143 = scmp.le.s32.totalorder 1, %s8
    %p144 = scmp.lt.s32.totalorder %s8, 3
    %p145 = pnand %p143, %p144
    %p146 = pneg %p145
    // Predicated region
    $region25: #{tpu_custom_call.1} parent=5 // pred_check
      _
    $region26: #{tpu_custom_call.1} parent=5 // pred_check_branch
      %148 = sbr.rel (%p145) target = $region28
    $region27: #{tpu_custom_call.1} parent=5 // pred_region
      %s149 = ssub.s32 %s8, 1
      %p150 = scmp.lt.s32.totalorder %s17, 1
      %s151 = scalar_select %p150, %s17, 1
      %p152 = scmp.lt.s32.totalorder %s18, 0
      %s153 = scalar_select %p152, %s18, 0
      %s154 = sadd.s32 %s153, %s151
      %s155 = smul.addr %s154, 4
      %s156 = scalar_lea.vmem %s0, %s155
      %p157 = pneg %p48
      %p158 = pneg %p45
      %p159 = scmp.lt.s32.totalorder %s17, 1
      %s160 = scalar_select %p159, %s17, 1
      %p161 = scmp.lt.s32.totalorder %s18, 0
      %s162 = scalar_select %p161, %s18, 0
      %s163 = sadd.s32 %s162, %s160
      %s164 = smul.addr %s163, 4
      %s165 = scalar_lea.vmem %s1, %s164
      %p166 = pneg %p76
      %p167 = pneg %p73
      %p168 = pneg %p104
      %p169 = pneg %p101
      %p170 = scmp.lt.s32.totalorder %s17, 1
      %s171 = scalar_select %p170, %s17, 1
      %p172 = scmp.lt.s32.totalorder %s18, 0
      %s173 = scalar_select %p172, %s18, 0
      %s174 = sadd.s32 %s173, %s171
      %s175 = smul.addr %s174, 8
      %s176 = scalar_lea.vmem %s2, %s175
      %p177 = scmp.lt.s32.totalorder %s17, 1
      %s178 = scalar_select %p177, %s17, 1
      %p179 = scmp.lt.s32.totalorder %s18, 0
      %s180 = scalar_select %p179, %s18, 0
      %s181 = sadd.s32 %s180, %s178
      %s182 = smul.addr %s181, 4
      %s183 = scalar_lea.vmem %s0, %s182
      %p184 = scmp.lt.s32.totalorder %s17, 1
      %s185 = scalar_select %p184, %s17, 1
      %p186 = scmp.lt.s32.totalorder %s18, 0
      %s187 = scalar_select %p186, %s18, 0
      %s188 = sadd.s32 %s187, %s185
      %s189 = smul.addr %s188, 4
      %s190 = scalar_lea.vmem %s1, %s189
      %p191 = scmp.lt.s32.totalorder %s17, 1
      %s192 = scalar_select %p191, %s17, 1
      %p193 = scmp.lt.s32.totalorder %s18, 0
      %s194 = scalar_select %p193, %s18, 0
      %s195 = sadd.s32 %s194, %s192
      %s196 = smul.addr %s195, 8
      %s197 = scalar_lea.vmem %s2, %s196
      %v198 = vld [vmem:[%s183] sm:$0x7]
      %vm199 = vcmask 124928
      %200 = vst.msk [vmem:[%s197] sm:$0x7] %vm199, %v198
      %v201 = vld [vmem:[%s190] sm:$0xf]
      %vm202 = vcmask 125952
      %203 = vst.msk [vmem:[%s197 + $0x3] sm:$0xf] %vm202, %v201
      %p204 = scmp.lt.s32.totalorder %s17, 1
      %s205 = scalar_select %p204, %s17, 1
      %p206 = scmp.lt.s32.totalorder %s18, 0
      %s207 = scalar_select %p206, %s18, 0
      %s208 = sadd.s32 %s207, %s205
      %s209 = smul.addr %s208, 8
      %s210 = scalar_lea.vmem %s2, %s209
      // Predicated region
      $region29: #{tpu_custom_call.1} parent=27 // pred_check
        %p211 = pneg %p101
      $region30: #{tpu_custom_call.1} parent=27 // pred_check_branch
        %213 = sbr.rel (%p211) target = $region32
      $region31: #{tpu_custom_call.1} parent=27 // pred_region
        _
      $region32: #{tpu_custom_call.1} parent=27 // pred_fallthru
        _
    $region28: #{tpu_custom_call.1} parent=5 // pred_fallthru
      _
    %p214 = scmp.le.s32.totalorder 2, %s8
    // Predicated region
    $region33: #{tpu_custom_call.1} parent=5 // pred_check
      %p215 = pneg %p214
    $region34: #{tpu_custom_call.1} parent=5 // pred_check_branch
      %217 = sbr.rel (%p215) target = $region36
    $region35: #{tpu_custom_call.1} parent=5 // pred_region
      %s218 = ssub.s32 %s8, 2
      // Predicated region
      $region37: #{tpu_custom_call.1} parent=35 // pred_check
        %p219 = pneg %p107
      $region38: #{tpu_custom_call.1} parent=35 // pred_check_branch
        %221 = sbr.rel (%p219) target = $region40
      $region39: #{tpu_custom_call.1} parent=35 // pred_region
        %p222 = scmp.lt.s32.totalorder %s19, 1
        %s223 = scalar_select %p222, %s19, 1
        %p224 = scmp.lt.s32.totalorder %s20, 0
        %s225 = scalar_select %p224, %s20, 0
        %s226 = sadd.s32 %s225, %s223
        %s227 = smul.addr %s226, 8
        %s228 = scalar_lea.vmem %s2, %s227
      $region40: #{tpu_custom_call.1} parent=35 // pred_fallthru
        _
    $region36: #{tpu_custom_call.1} parent=5 // pred_fallthru
      _
  $region6: #{tpu_custom_call.1} parent=0 // loop_footer
    %s12 = sadd.s32 1, %s8
  $region7: #{tpu_custom_call.1} parent=0 // loop_footer_branch
    %7 = sbr.rel target = $region3
  $region8: #{tpu_custom_call.1} parent=0 // loop_exit
    _

</llo_original>
